<compile_context>
chip_gen: v6e
topology: v6e:2x2x1
jax: 0.10.0
libtpu: 0.0.40
codegen_flags: <defaults>
</compile_context>

<pallas_src>
import functools

import jax
import jax.numpy as jnp
from jax.experimental import pallas as pl
from jax.experimental.pallas import tpu as pltpu

LN_EPS = 1e-5      # nn.LayerNorm default
LANE = 128
SUBLANE = 8
MAX_TILE_B = 1024  # cap per-tile rows for very large batches


def _round_up(n, m):
    return ((n + m - 1) // m) * m


def _batch_tiling(batch):
    """Pick (tile_b, n_tiles) for the batch axis.

    <=128 rows: one small tile rounded to the sublane (8) — no dead rows for
    inference / single-sample calls. Larger: an even number (>=2) of big tiles so
    v7x megacore can shard them, with per-tile rows capped at MAX_TILE_B.
    """
    bp = _round_up(max(batch, 1), SUBLANE)
    if bp <= LANE:
        return bp, 1
    n = 2
    while _round_up(-(-bp // n), SUBLANE) > MAX_TILE_B:
        n += 2
    tile = _round_up(-(-bp // n), SUBLANE)
    return tile, n


def _ln_affine_true_width(h, gamma, beta, true_d):
    """LayerNorm (with affine) over the last axis, stats over the TRUE feature width.

    Padded lanes of `h` are exactly zero pre-LN, so full-lane sums are already the
    true sums; we only divide by the real width. Single pass (sum + sum-of-squares)
    halves the cross-lane reductions; rsqrt goes to the EUP slot. gamma/beta padded
    lanes are zero, which re-zeroes the padded lanes of the result.
    """
    inv_d = jnp.float32(1.0 / true_d)
    s = jnp.sum(h, axis=-1, keepdims=True)
    ss = jnp.sum(h * h, axis=-1, keepdims=True)
    mu = s * inv_d
    var = jnp.maximum(ss * inv_d - mu * mu, 0.0)   # guard against cancellation
    hn = (h - mu) * jax.lax.rsqrt(var + LN_EPS)
    return hn * gamma + beta


def _make_kernel(fc1_dims, fc2_dims):
    def kernel(x_ref, w1_ref, b1_ref, g1_ref, be1_ref,
               w2_ref, b2_ref, g2_ref, be2_ref, wq_ref, bq_ref, out_ref):
        x = x_ref[...]                                                   # (TB, D)

        # fc1 -> LayerNorm(affine) -> ReLU
        h = jnp.dot(x, w1_ref[...], preferred_element_type=jnp.float32) + b1_ref[...]
        h = _ln_affine_true_width(h, g1_ref[...], be1_ref[...], fc1_dims)
        h = jnp.maximum(h, 0.0)

        # fc2 -> LayerNorm(affine)   (no ReLU, matching the reference forward)
        h = jnp.dot(h, w2_ref[...], preferred_element_type=jnp.float32) + b2_ref[...]
        h = _ln_affine_true_width(h, g2_ref[...], be2_ref[...], fc2_dims)

        # q head: single output column -> VPU multiply + XLU lane reduce (skip MXU);
        # bias comes from SMEM as a scalar broadcast.
        q = jnp.sum(h * wq_ref[...], axis=-1, keepdims=True) + bq_ref[0]
        out_ref[...] = q                                                 # (TB, 1)

    return kernel


# ------------------------- parameter prep (done once) -------------------------
def _pad2(a, rows, cols):
    a = a.astype(jnp.float32)
    return jnp.pad(a, ((0, rows - a.shape[0]), (0, cols - a.shape[1])))


def _pad_row(v, cols):
    return _pad2(v.reshape(1, -1), 1, cols)


def prepare_critic_params(params):
    """Pad parameters to lane-dense shapes ONCE (at init / after optimizer step).

    Returns (true_dims, padded_params) ready for the jitted forward — no per-call
    padding/reshaping remains on the hot path.
    """
    w1, b1, g1, be1, w2, b2, g2, be2, wq, bq = params
    input_dims, fc1_dims = w1.shape
    fc2_dims = w2.shape[1]
    h1p = _round_up(fc1_dims, LANE)
    h2p = _round_up(fc2_dims, LANE)

    padded = (
        _pad2(w1, input_dims, h1p),        # K-dim stays at the TRUE input width
        _pad_row(b1, h1p), _pad_row(g1, h1p), _pad_row(be1, h1p),
        _pad2(w2, h1p, h2p),
        _pad_row(b2, h2p), _pad_row(g2, h2p), _pad_row(be2, h2p),
        _pad_row(wq.reshape(-1), h2p),     # q weights as a lane row
        bq.reshape(1).astype(jnp.float32),  # scalar -> SMEM
    )
    return (input_dims, fc1_dims, fc2_dims), padded


# ------------------------------- forward pass --------------------------------
@functools.partial(jax.jit, static_argnums=(2,))
def _forward_impl(x, padded_params, true_dims):
    input_dims, fc1_dims, fc2_dims = true_dims
    (w1p, b1p, g1p, be1p, w2p, b2p, g2p, be2p, wqp, bqp) = padded_params
    h1p = w1p.shape[1]
    h2p = w2p.shape[1]

    batch = x.shape[0]
    tile_b, n_tiles = _batch_tiling(batch)
    bp = tile_b * n_tiles

    xp = x.astype(jnp.float32)
    if bp != batch:                         # row-only pad; feature dim stays true width
        xp = jnp.pad(xp, ((0, bp - batch), (0, 0)))

    out = pl.pallas_call(
        _make_kernel(fc1_dims, fc2_dims),
        out_shape=jax.ShapeDtypeStruct((bp, 1), jnp.float32),
        grid=(n_tiles,),
        in_specs=[
            # batch tile per grid step; last dim == full array dim (no 128 padding)
            pl.BlockSpec((tile_b, input_dims), lambda i: (i, 0)),
            # weights / LN params: constant index maps -> stay VMEM-resident
            pl.BlockSpec((input_dims, h1p), lambda i: (0, 0)),
            pl.BlockSpec((1, h1p), lambda i: (0, 0)),
            pl.BlockSpec((1, h1p), lambda i: (0, 0)),
            pl.BlockSpec((1, h1p), lambda i: (0, 0)),
            pl.BlockSpec((h1p, h2p), lambda i: (0, 0)),
            pl.BlockSpec((1, h2p), lambda i: (0, 0)),
            pl.BlockSpec((1, h2p), lambda i: (0, 0)),
            pl.BlockSpec((1, h2p), lambda i: (0, 0)),
            pl.BlockSpec((1, h2p), lambda i: (0, 0)),
            # scalar q bias lives in SMEM (no 8x128 VMEM tile, no extra DMA buffer)
            pl.BlockSpec(memory_space=pltpu.MemorySpace.SMEM),
        ],
        out_specs=pl.BlockSpec((tile_b, 1), lambda i: (i, 0)),
        compiler_params=pltpu.CompilerParams(
            dimension_semantics=("parallel",)),   # shard batch tiles across TCs (v7x)
    )(xp, w1p, b1p, g1p, be1p, w2p, b2p, g2p, be2p, wqp, bqp)
    return out[:batch]


def critic_forward_batched(x, prepared):
    """Batched forward. x: (B, input_dims). Returns (B, 1) f32."""
    true_dims, padded = prepared
    return _forward_impl(x, padded, true_dims)


def critic_forward(state_action_vec, prepared):
    """Single-sample forward matching the original module: 1D input, (1,) output."""
    return critic_forward_batched(state_action_vec.reshape(1, -1), prepared).reshape(1)


# --------------------------------- init --------------------------------------
def init_critic_params(key, input_dims, fc1_dims, fc2_dims):
    """Init matching CriticNetwork.__init__ (plus LayerNorm affine defaults).

    f1 = 1/sqrt(fc1.weight.size(0)) = 1/sqrt(fc1_dims)
    f2 = 1/sqrt(fc2.weight.size(0)) = 1/sqrt(fc2_dims)
    f3 = 0.003
    Weights stored as (in_features, out_features) so the kernel computes y = x @ W + b.
    LayerNorm: gamma = 1, beta = 0 (elementwise_affine=True default).
    """
    k = jax.random.split(key, 6)
    f1 = 1.0 / float(fc1_dims) ** 0.5
    f2 = 1.0 / float(fc2_dims) ** 0.5
    f3 = 0.003
    w1 = jax.random.uniform(k[0], (input_dims, fc1_dims), jnp.float32, -f1, f1)
    b1 = jax.random.uniform(k[1], (fc1_dims,), jnp.float32, -f1, f1)
    g1 = jnp.ones((fc1_dims,), jnp.float32)
    be1 = jnp.zeros((fc1_dims,), jnp.float32)
    w2 = jax.random.uniform(k[2], (fc1_dims, fc2_dims), jnp.float32, -f2, f2)
    b2 = jax.random.uniform(k[3], (fc2_dims,), jnp.float32, -f2, f2)
    g2 = jnp.ones((fc2_dims,), jnp.float32)
    be2 = jnp.zeros((fc2_dims,), jnp.float32)
    wq = jax.random.uniform(k[4], (fc2_dims, 1), jnp.float32, -f3, f3)
    bq = jax.random.uniform(k[5], (1,), jnp.float32, -f3, f3)
    return (w1, b1, g1, be1, w2, b2, g2, be2, wq, bq)


# ----------------------------- pure-JAX reference -----------------------------
def _ln_ref(h, gamma, beta):
    mu = jnp.mean(h, axis=-1, keepdims=True)
    var = jnp.mean((h - mu) * (h - mu), axis=-1, keepdims=True)
    return (h - mu) / jnp.sqrt(var + LN_EPS) * gamma.reshape(1, -1) + beta.reshape(1, -1)


def critic_forward_ref(x, params):
    w1, b1, g1, be1, w2, b2, g2, be2, wq, bq = params
    hi = jax.lax.Precision.HIGHEST
    x = x.astype(jnp.float32)
    h = jnp.matmul(x, w1, precision=hi) + b1.reshape(1, -1)
    h = _ln_ref(h, g1, be1)
    h = jnp.maximum(h, 0.0)
    h = jnp.matmul(h, w2, precision=hi) + b2.reshape(1, -1)
    h = _ln_ref(h, g2, be2)
    q = jnp.matmul(h, wq, precision=hi) + bq.reshape(1, -1)
    return q


if __name__ == "__main__":
    # Shapes consistent with the module: the critic sees the concatenated,
    # flattened states + actions of total length input_dims.
    state_dim, action_dim = 24, 8
    input_dims = state_dim + action_dim        # 32
    fc1_dims, fc2_dims = 64, 32

    key = jax.random.PRNGKey(0)
    k_s, k_a, k_p, k_b = jax.random.split(key, 4)
    params = init_critic_params(k_p, input_dims, fc1_dims, fc2_dims)
    prepared = prepare_critic_params(params)   # pad once, off the hot path

    # --- single state-action vector (matches the original module's forward) ---
    states = jax.random.normal(k_s, (state_dim,), jnp.float32)
    actions = jax.random.normal(k_a, (action_dim,), jnp.float32)
    state_action = jnp.concatenate([states, actions], axis=0)      # (input_dims,)

    q1 = critic_forward(state_action, prepared)
    jax.block_until_ready(q1)
    q1_ref = critic_forward_ref(state_action.reshape(1, -1), params).reshape(1)
    assert q1.shape == (1,)
    assert jnp.allclose(q1, q1_ref, atol=1e-4, rtol=1e-4), (q1, q1_ref)

    # --- batched minibatch: exercises the multi-tile (megacore) path ----------
    B = 200                                     # not a multiple of 8: tests row padding
    xb = jax.random.normal(k_b, (B, input_dims), jnp.float32)
    qb = critic_forward_batched(xb, prepared)
    jax.block_until_ready(qb)
    qb_ref = critic_forward_ref(xb, params)
    assert qb.shape == (B, 1)
    assert jnp.allclose(qb, qb_ref, atol=1e-4, rtol=1e-4), \
        float(jnp.max(jnp.abs(qb - qb_ref)))

    # --- tiny batch: single small tile, no dead-row padding to 128 ------------
    xs = jax.random.normal(k_b, (2, input_dims), jnp.float32)
    qs = critic_forward_batched(xs, prepared)
    jax.block_until_ready(qs)
    qs_ref = critic_forward_ref(xs, params)
    assert jnp.allclose(qs, qs_ref, atol=1e-4, rtol=1e-4)

    print("KERNEL_OK")
</pallas_src>

<mosaic_0001>
module attributes {stable_mosaic.version = 11 : i64} {
  func.func @kernel(%arg0: i32, %arg1: memref<8x32xf32, #tpu.memory_space<vmem>>, %arg2: memref<32x128xf32, #tpu.memory_space<vmem>>, %arg3: memref<1x128xf32, #tpu.memory_space<vmem>>, %arg4: memref<1x128xf32, #tpu.memory_space<vmem>>, %arg5: memref<1x128xf32, #tpu.memory_space<vmem>>, %arg6: memref<128x128xf32, #tpu.memory_space<vmem>>, %arg7: memref<1x128xf32, #tpu.memory_space<vmem>>, %arg8: memref<1x128xf32, #tpu.memory_space<vmem>>, %arg9: memref<1x128xf32, #tpu.memory_space<vmem>>, %arg10: memref<1x128xf32, #tpu.memory_space<vmem>>, %arg11: memref<1xf32, #tpu.memory_space<smem>>, %arg12: memref<8x1xf32, #tpu.memory_space<vmem>>) attributes {dimension_semantics = [#tpu.dimension_semantics<parallel>], iteration_bounds = array<i64: 1>, scalar_prefetch = 0 : i64, scratch_operands = 0 : i64, tpu.core_type = #tpu.core_type<tc>, window_params = [{transform_indices = @transform_0, window_bounds = array<i64: 8, 32>}, {pipeline_mode = #tpu.pipeline_mode<synchronous>, transform_indices = @transform_1, window_bounds = array<i64: 32, 128>}, {pipeline_mode = #tpu.pipeline_mode<synchronous>, transform_indices = @transform_2, window_bounds = array<i64: 1, 128>}, {pipeline_mode = #tpu.pipeline_mode<synchronous>, transform_indices = @transform_3, window_bounds = array<i64: 1, 128>}, {pipeline_mode = #tpu.pipeline_mode<synchronous>, transform_indices = @transform_4, window_bounds = array<i64: 1, 128>}, {pipeline_mode = #tpu.pipeline_mode<synchronous>, transform_indices = @transform_5, window_bounds = array<i64: 128, 128>}, {pipeline_mode = #tpu.pipeline_mode<synchronous>, transform_indices = @transform_6, window_bounds = array<i64: 1, 128>}, {pipeline_mode = #tpu.pipeline_mode<synchronous>, transform_indices = @transform_7, window_bounds = array<i64: 1, 128>}, {pipeline_mode = #tpu.pipeline_mode<synchronous>, transform_indices = @transform_8, window_bounds = array<i64: 1, 128>}, {pipeline_mode = #tpu.pipeline_mode<synchronous>, transform_indices = @transform_9, window_bounds = array<i64: 1, 128>}, {transform_indices = @transform_10, window_bounds = array<i64: 1>}, {transform_indices = @transform_11, window_bounds = array<i64: 8, 1>}]} {
    %c0 = arith.constant 0 : index
    %c0_0 = arith.constant 0 : index
    %0 = vector.load %arg1[%c0, %c0_0] : memref<8x32xf32, #tpu.memory_space<vmem>>, vector<8x32xf32>
    %c0_1 = arith.constant 0 : index
    %c0_2 = arith.constant 0 : index
    %1 = vector.load %arg2[%c0_1, %c0_2] : memref<32x128xf32, #tpu.memory_space<vmem>>, vector<32x128xf32>
    %cst = arith.constant dense<0.000000e+00> : vector<8x128xf32>
    %2 = tpu.matmul %0, %1, %cst {dimension_numbers = #tpu.dot_dimension_numbers<[1], [0], [0], [1], [0, 0, 1, 1], [], []>} : vector<8x32xf32>, vector<32x128xf32>, vector<8x128xf32> -> vector<8x128xf32>
    %c0_3 = arith.constant 0 : index
    %c0_4 = arith.constant 0 : index
    %3 = vector.load %arg3[%c0_3, %c0_4] : memref<1x128xf32, #tpu.memory_space<vmem>>, vector<1x128xf32>
    %4 = vector.broadcast %3 : vector<1x128xf32> to vector<8x128xf32>
    %5 = arith.addf %2, %4 : vector<8x128xf32>
    %c0_5 = arith.constant 0 : index
    %c0_6 = arith.constant 0 : index
    %6 = vector.load %arg4[%c0_5, %c0_6] : memref<1x128xf32, #tpu.memory_space<vmem>>, vector<1x128xf32>
    %c0_7 = arith.constant 0 : index
    %c0_8 = arith.constant 0 : index
    %7 = vector.load %arg5[%c0_7, %c0_8] : memref<1x128xf32, #tpu.memory_space<vmem>>, vector<1x128xf32>
    %cst_9 = arith.constant dense<0.000000e+00> : vector<8xf32>
    %8 = vector.multi_reduction <add>, %5, %cst_9 [1] : vector<8x128xf32> to vector<8xf32>
    %9 = vector.shape_cast %8 : vector<8xf32> to vector<8x1xf32>
    %10 = arith.mulf %5, %5 : vector<8x128xf32>
    %cst_10 = arith.constant dense<0.000000e+00> : vector<8xf32>
    %11 = vector.multi_reduction <add>, %10, %cst_10 [1] : vector<8x128xf32> to vector<8xf32>
    %12 = vector.shape_cast %11 : vector<8xf32> to vector<8x1xf32>
    %cst_11 = arith.constant 1.562500e-02 : f32
    %13 = vector.broadcast %cst_11 : f32 to vector<8x1xf32>
    %14 = arith.mulf %9, %13 : vector<8x1xf32>
    %cst_12 = arith.constant 1.562500e-02 : f32
    %15 = vector.broadcast %cst_12 : f32 to vector<8x1xf32>
    %16 = arith.mulf %12, %15 : vector<8x1xf32>
    %17 = arith.mulf %14, %14 : vector<8x1xf32>
    %18 = arith.subf %16, %17 : vector<8x1xf32>
    %cst_13 = arith.constant 0.000000e+00 : f32
    %19 = vector.broadcast %cst_13 : f32 to vector<8x1xf32>
    %20 = arith.maximumf %18, %19 : vector<8x1xf32>
    %21 = vector.broadcast %14 : vector<8x1xf32> to vector<8x128xf32>
    %22 = arith.subf %5, %21 : vector<8x128xf32>
    %cst_14 = arith.constant 9.99999974E-6 : f32
    %23 = vector.broadcast %cst_14 : f32 to vector<8x1xf32>
    %24 = arith.addf %20, %23 : vector<8x1xf32>
    %25 = math.rsqrt %24 : vector<8x1xf32>
    %26 = vector.broadcast %25 : vector<8x1xf32> to vector<8x128xf32>
    %27 = arith.mulf %22, %26 : vector<8x128xf32>
    %28 = vector.broadcast %6 : vector<1x128xf32> to vector<8x128xf32>
    %29 = arith.mulf %27, %28 : vector<8x128xf32>
    %30 = vector.broadcast %7 : vector<1x128xf32> to vector<8x128xf32>
    %31 = arith.addf %29, %30 : vector<8x128xf32>
    %cst_15 = arith.constant 0.000000e+00 : f32
    %32 = vector.broadcast %cst_15 : f32 to vector<8x128xf32>
    %33 = arith.maximumf %31, %32 : vector<8x128xf32>
    %c0_16 = arith.constant 0 : index
    %c0_17 = arith.constant 0 : index
    %34 = vector.load %arg6[%c0_16, %c0_17] : memref<128x128xf32, #tpu.memory_space<vmem>>, vector<128x128xf32>
    %cst_18 = arith.constant dense<0.000000e+00> : vector<8x128xf32>
    %35 = tpu.matmul %33, %34, %cst_18 {dimension_numbers = #tpu.dot_dimension_numbers<[1], [0], [0], [1], [0, 0, 1, 1], [], []>} : vector<8x128xf32>, vector<128x128xf32>, vector<8x128xf32> -> vector<8x128xf32>
    %c0_19 = arith.constant 0 : index
    %c0_20 = arith.constant 0 : index
    %36 = vector.load %arg7[%c0_19, %c0_20] : memref<1x128xf32, #tpu.memory_space<vmem>>, vector<1x128xf32>
    %37 = vector.broadcast %36 : vector<1x128xf32> to vector<8x128xf32>
    %38 = arith.addf %35, %37 : vector<8x128xf32>
    %c0_21 = arith.constant 0 : index
    %c0_22 = arith.constant 0 : index
    %39 = vector.load %arg8[%c0_21, %c0_22] : memref<1x128xf32, #tpu.memory_space<vmem>>, vector<1x128xf32>
    %c0_23 = arith.constant 0 : index
    %c0_24 = arith.constant 0 : index
    %40 = vector.load %arg9[%c0_23, %c0_24] : memref<1x128xf32, #tpu.memory_space<vmem>>, vector<1x128xf32>
    %cst_25 = arith.constant dense<0.000000e+00> : vector<8xf32>
    %41 = vector.multi_reduction <add>, %38, %cst_25 [1] : vector<8x128xf32> to vector<8xf32>
    %42 = vector.shape_cast %41 : vector<8xf32> to vector<8x1xf32>
    %43 = arith.mulf %38, %38 : vector<8x128xf32>
    %cst_26 = arith.constant dense<0.000000e+00> : vector<8xf32>
    %44 = vector.multi_reduction <add>, %43, %cst_26 [1] : vector<8x128xf32> to vector<8xf32>
    %45 = vector.shape_cast %44 : vector<8xf32> to vector<8x1xf32>
    %cst_27 = arith.constant 3.125000e-02 : f32
    %46 = vector.broadcast %cst_27 : f32 to vector<8x1xf32>
    %47 = arith.mulf %42, %46 : vector<8x1xf32>
    %cst_28 = arith.constant 3.125000e-02 : f32
    %48 = vector.broadcast %cst_28 : f32 to vector<8x1xf32>
    %49 = arith.mulf %45, %48 : vector<8x1xf32>
    %50 = arith.mulf %47, %47 : vector<8x1xf32>
    %51 = arith.subf %49, %50 : vector<8x1xf32>
    %cst_29 = arith.constant 0.000000e+00 : f32
    %52 = vector.broadcast %cst_29 : f32 to vector<8x1xf32>
    %53 = arith.maximumf %51, %52 : vector<8x1xf32>
    %54 = vector.broadcast %47 : vector<8x1xf32> to vector<8x128xf32>
    %55 = arith.subf %38, %54 : vector<8x128xf32>
    %cst_30 = arith.constant 9.99999974E-6 : f32
    %56 = vector.broadcast %cst_30 : f32 to vector<8x1xf32>
    %57 = arith.addf %53, %56 : vector<8x1xf32>
    %58 = math.rsqrt %57 : vector<8x1xf32>
    %59 = vector.broadcast %58 : vector<8x1xf32> to vector<8x128xf32>
    %60 = arith.mulf %55, %59 : vector<8x128xf32>
    %61 = vector.broadcast %39 : vector<1x128xf32> to vector<8x128xf32>
    %62 = arith.mulf %60, %61 : vector<8x128xf32>
    %63 = vector.broadcast %40 : vector<1x128xf32> to vector<8x128xf32>
    %64 = arith.addf %62, %63 : vector<8x128xf32>
    %c0_31 = arith.constant 0 : index
    %c0_32 = arith.constant 0 : index
    %65 = vector.load %arg10[%c0_31, %c0_32] : memref<1x128xf32, #tpu.memory_space<vmem>>, vector<1x128xf32>
    %66 = vector.broadcast %65 : vector<1x128xf32> to vector<8x128xf32>
    %67 = arith.mulf %64, %66 : vector<8x128xf32>
    %cst_33 = arith.constant dense<0.000000e+00> : vector<8xf32>
    %68 = vector.multi_reduction <add>, %67, %cst_33 [1] : vector<8x128xf32> to vector<8xf32>
    %69 = vector.shape_cast %68 : vector<8xf32> to vector<8x1xf32>
    %c0_34 = arith.constant 0 : index
    %70 = memref.load %arg11[%c0_34] : memref<1xf32, #tpu.memory_space<smem>>
    %71 = vector.broadcast %70 : f32 to vector<8x1xf32>
    %72 = arith.addf %69, %71 : vector<8x1xf32>
    %c0_35 = arith.constant 0 : index
    %c0_36 = arith.constant 0 : index
    %73 = vector.load %arg12[%c0_35, %c0_36] : memref<8x1xf32, #tpu.memory_space<vmem>>, vector<8x1xf32>
    tpu.vector_store %arg12[%c0_35, %c0_36], %72 {strides = array<i32>} : memref<8x1xf32, #tpu.memory_space<vmem>>, vector<8x1xf32>,
    return
  }
  func.func @transform_0(%arg0: i32) -> (i32, i32) {
    %c0_i32 = arith.constant 0 : i32
    %c0_i32_0 = arith.constant 0 : i32
    return %arg0, %c0_i32 : i32, i32
  }
  func.func @transform_1(%arg0: i32) -> (i32, i32) {
    %c0_i32 = arith.constant 0 : i32
    %c0_i32_0 = arith.constant 0 : i32
    %c0_i32_1 = arith.constant 0 : i32
    return %c0_i32, %c0_i32_0 : i32, i32
  }
  func.func @transform_2(%arg0: i32) -> (i32, i32) {
    %c0_i32 = arith.constant 0 : i32
    %c0_i32_0 = arith.constant 0 : i32
    %c0_i32_1 = arith.constant 0 : i32
    return %c0_i32, %c0_i32_0 : i32, i32
  }
  func.func @transform_3(%arg0: i32) -> (i32, i32) {
    %c0_i32 = arith.constant 0 : i32
    %c0_i32_0 = arith.constant 0 : i32
    %c0_i32_1 = arith.constant 0 : i32
    return %c0_i32, %c0_i32_0 : i32, i32
  }
  func.func @transform_4(%arg0: i32) -> (i32, i32) {
    %c0_i32 = arith.constant 0 : i32
    %c0_i32_0 = arith.constant 0 : i32
    %c0_i32_1 = arith.constant 0 : i32
    return %c0_i32, %c0_i32_0 : i32, i32
  }
  func.func @transform_5(%arg0: i32) -> (i32, i32) {
    %c0_i32 = arith.constant 0 : i32
    %c0_i32_0 = arith.constant 0 : i32
    %c0_i32_1 = arith.constant 0 : i32
    return %c0_i32, %c0_i32_0 : i32, i32
  }
  func.func @transform_6(%arg0: i32) -> (i32, i32) {
    %c0_i32 = arith.constant 0 : i32
    %c0_i32_0 = arith.constant 0 : i32
    %c0_i32_1 = arith.constant 0 : i32
    return %c0_i32, %c0_i32_0 : i32, i32
  }
  func.func @transform_7(%arg0: i32) -> (i32, i32) {
    %c0_i32 = arith.constant 0 : i32
    %c0_i32_0 = arith.constant 0 : i32
    %c0_i32_1 = arith.constant 0 : i32
    return %c0_i32, %c0_i32_0 : i32, i32
  }
  func.func @transform_8(%arg0: i32) -> (i32, i32) {
    %c0_i32 = arith.constant 0 : i32
    %c0_i32_0 = arith.constant 0 : i32
    %c0_i32_1 = arith.constant 0 : i32
    return %c0_i32, %c0_i32_0 : i32, i32
  }
  func.func @transform_9(%arg0: i32) -> (i32, i32) {
    %c0_i32 = arith.constant 0 : i32
    %c0_i32_0 = arith.constant 0 : i32
    %c0_i32_1 = arith.constant 0 : i32
    return %c0_i32, %c0_i32_0 : i32, i32
  }
  func.func @transform_10(%arg0: i32) -> i32 {
    %c0_i32 = arith.constant 0 : i32
    %c0_i32_0 = arith.constant 0 : i32
    return %c0_i32 : i32
  }
  func.func @transform_11(%arg0: i32) -> (i32, i32) {
    %c0_i32 = arith.constant 0 : i32
    %c0_i32_0 = arith.constant 0 : i32
    return %arg0, %c0_i32 : i32, i32
  }
}

</mosaic_0001>

<llo_original>
// kernel: _forward_impl.1
$region0: #{_forward_impl.1}
  #allocation0 [shape = 'u32[]', space=smem, size = 0x4, offset = 0x4, fixed_abs, tag = 'smem constant byte address 0x4 - core index']
  #allocation1 [shape = 'u32[144,128]{1,0:T(1,128)}', space=vmem, size = 0x12000, scoped, tag = 'internal scratch']
  #allocation2 [shape = 'f32[1]{0:T(128)S(6)}', space=smem, size = 0x200, scoped, tag = 'scoped memory for _forward_impl.1']
  %s0 = inlined_call_operand.vmem [shape: f32[8,32], index: 0, kind: input, shape index: {}]
  %s1 = inlined_call_operand.hbm [shape: f32[32,128], index: 1, kind: input, shape index: {}]
  %s2 = inlined_call_operand.vmem [shape: f32[1,128], index: 2, kind: input, shape index: {}]
  %s3 = inlined_call_operand.vmem [shape: f32[1,128], index: 3, kind: input, shape index: {}]
  %s4 = inlined_call_operand.vmem [shape: f32[1,128], index: 4, kind: input, shape index: {}]
  %s5 = inlined_call_operand.hbm [shape: f32[128,128], index: 5, kind: input, shape index: {}]
  %s6 = inlined_call_operand.vmem [shape: f32[1,128], index: 6, kind: input, shape index: {}]
  %s7 = inlined_call_operand.vmem [shape: f32[1,128], index: 7, kind: input, shape index: {}]
  %s8 = inlined_call_operand.vmem [shape: f32[1,128], index: 8, kind: input, shape index: {}]
  %s9 = inlined_call_operand.vmem [shape: f32[1,128], index: 9, kind: input, shape index: {}]
  %s10 = inlined_call_operand.<no memory space> [shape: f32[1], index: 10, kind: input, shape index: {}]
  %s11 = inlined_call_operand.vmem [shape: f32[8,1], index: 11, kind: output, shape index: {}]
  %s12 = sld [smem:[#allocation0]]
  $region62: #{_forward_impl.1} parent=0
    _
  %s14 = ssub.s32 1, %s12
  %s15 = scalar_select 0, %s14, %s12
  %16 = sst [smem:[#allocation2]] %s10
  $region1: #{_forward_impl.1} parent=0
    #allocation3 [shape = 'u8[16384]{0}', space=vmem, size = 0x4000, scoped, tag = 'input window, operand 1, single buffered']
    #allocation4 [shape = 's32[1]{0}', space=sflag, size = 0x4, scoped, tag = 'scoped memory for _forward_impl.1']
    #allocation5 [shape = 'u8[65536]{0}', space=vmem, size = 0x10000, scoped, tag = 'input window, operand 5, single buffered']
    #allocation6 [shape = 's32[1]{0}', space=sflag, size = 0x4, scoped, tag = 'scoped memory for _forward_impl.1']
    %17 = vsyncpa [#allocation4], 0
    %18 = vsyncpa [#allocation6], 0
    // Predicated region
    $region2: #{_forward_impl.1} parent=1 // pred_check
      _
    $region3: #{_forward_impl.1} parent=1 // pred_check_branch
      %20 = sbr.rel (0) target = $region5
    $region4: #{_forward_impl.1} parent=1 // pred_region
      _
    $region5: #{_forward_impl.1} parent=1 // pred_fallthru
      _
    // Predicated region
    $region6: #{_forward_impl.1} parent=1 // pred_check
      _
    $region7: #{_forward_impl.1} parent=1 // pred_check_branch
      %22 = sbr.rel (0) target = $region9
    $region8: #{_forward_impl.1} parent=1 // pred_region
      %s24 = ssub.s32 512, 512
      %25 = vsyncadd [#allocation4], %s24
      %s26 = sshll.u32 [#allocation3], 4
      %s27 = int_to_ptr.vmem [resolvable:$true] %s26
      %32 = dma.hbm_to_vmem [thread:$0]  %s1, 512, %s27, [#allocation4], 128, 128, 8
    $region9: #{_forward_impl.1} parent=1 // pred_fallthru
      _
    // Predicated region
    $region10: #{_forward_impl.1} parent=1 // pred_check
      _
    $region11: #{_forward_impl.1} parent=1 // pred_check_branch
      %34 = sbr.rel (0) target = $region13
    $region12: #{_forward_impl.1} parent=1 // pred_region
      _
    $region13: #{_forward_impl.1} parent=1 // pred_fallthru
      _
    // Predicated region
    $region14: #{_forward_impl.1} parent=1 // pred_check
      _
    $region15: #{_forward_impl.1} parent=1 // pred_check_branch
      %36 = sbr.rel (0) target = $region17
    $region16: #{_forward_impl.1} parent=1 // pred_region
      _
    $region17: #{_forward_impl.1} parent=1 // pred_fallthru
      _
    // Predicated region
    $region18: #{_forward_impl.1} parent=1 // pred_check
      _
    $region19: #{_forward_impl.1} parent=1 // pred_check_branch
      %38 = sbr.rel (0) target = $region21
    $region20: #{_forward_impl.1} parent=1 // pred_region
      _
    $region21: #{_forward_impl.1} parent=1 // pred_fallthru
      _
    // Predicated region
    $region22: #{_forward_impl.1} parent=1 // pred_check
      _
    $region23: #{_forward_impl.1} parent=1 // pred_check_branch
      %40 = sbr.rel (0) target = $region25
    $region24: #{_forward_impl.1} parent=1 // pred_region
      %s42 = ssub.s32 2048, 2048
      %43 = vsyncadd [#allocation6], %s42
      %s44 = sshll.u32 [#allocation5], 4
      %s45 = int_to_ptr.vmem [resolvable:$true] %s44
      %50 = dma.hbm_to_vmem [thread:$0]  %s5, 2048, %s45, [#allocation6], 128, 128, 8
    $region25: #{_forward_impl.1} parent=1 // pred_fallthru
      _
    // Predicated region
    $region26: #{_forward_impl.1} parent=1 // pred_check
      _
    $region27: #{_forward_impl.1} parent=1 // pred_check_branch
      %52 = sbr.rel (0) target = $region29
    $region28: #{_forward_impl.1} parent=1 // pred_region
      _
    $region29: #{_forward_impl.1} parent=1 // pred_fallthru
      _
    // Predicated region
    $region30: #{_forward_impl.1} parent=1 // pred_check
      _
    $region31: #{_forward_impl.1} parent=1 // pred_check_branch
      %54 = sbr.rel (0) target = $region33
    $region32: #{_forward_impl.1} parent=1 // pred_region
      _
    $region33: #{_forward_impl.1} parent=1 // pred_fallthru
      _
    // Predicated region
    $region34: #{_forward_impl.1} parent=1 // pred_check
      _
    $region35: #{_forward_impl.1} parent=1 // pred_check_branch
      %56 = sbr.rel (0) target = $region37
    $region36: #{_forward_impl.1} parent=1 // pred_region
      _
    $region37: #{_forward_impl.1} parent=1 // pred_fallthru
      _
    // Predicated region
    $region38: #{_forward_impl.1} parent=1 // pred_check
      _
    $region39: #{_forward_impl.1} parent=1 // pred_check_branch
      %58 = sbr.rel (0) target = $region41
    $region40: #{_forward_impl.1} parent=1 // pred_region
      _
    $region41: #{_forward_impl.1} parent=1 // pred_fallthru
      _
    // Predicated region
    $region42: #{_forward_impl.1} parent=1 // pred_check
      _
    $region43: #{_forward_impl.1} parent=1 // pred_check_branch
      %60 = sbr.rel (0) target = $region45
    $region44: #{_forward_impl.1} parent=1 // pred_region
      _
    $region45: #{_forward_impl.1} parent=1 // pred_fallthru
      _
    // Predicated region
    $region46: #{_forward_impl.1} parent=1 // pred_check
      _
    $region47: #{_forward_impl.1} parent=1 // pred_check_branch
      %62 = sbr.rel (0) target = $region49
    $region48: #{_forward_impl.1} parent=1 // pred_region
      %63 = dma.done [#allocation4], 512
    $region49: #{_forward_impl.1} parent=1 // pred_fallthru
      _
    // Predicated region
    $region50: #{_forward_impl.1} parent=1 // pred_check
      _
    $region51: #{_forward_impl.1} parent=1 // pred_check_branch
      %65 = sbr.rel (0) target = $region53
    $region52: #{_forward_impl.1} parent=1 // pred_region
      %66 = dma.done [#allocation6], 2048
    $region53: #{_forward_impl.1} parent=1 // pred_fallthru
      _
    %v67 = vld [vmem:[%s0] sm:$0xff]
    %v68 = vld [vmem:[#allocation3] sm:$0xff]
    %v69 = vld [vmem:[#allocation3 + $0x8] sm:$0xff]
    %v70 = vld [vmem:[#allocation3 + $0x10] sm:$0xff]
    %v71 = vld [vmem:[#allocation3 + $0x18] sm:$0xff]
    %v72 = vld [vmem:[%s2] sm:$0x1]
    %v74 = vlaneseq
    %v75 = vshrl.u32 %v74, 7
    %v76 = vsub.s32 0, %v75
    %v77 = vrot.slane %v72, %v76
    %vm79 = vcmask 261120
    %v81 = vsel %vm79, %v67, 0
    %83 = vmatprep.subr.mxu0 0.0
    %84 = vmatpush1.msra.mxu0 0.0
    %85 = vmatprep.subr.mxu0 0.0
    %86 = vmatpush1.msra.mxu0 0.0
    %87 = vmatprep.subr.mxu0 0.0
    %88 = vmatpush1.msra.mxu0 0.0
    %89 = vmatprep.subr.mxu0 0.0
    %90 = vmatpush1.msra.mxu0 0.0
    %91 = vmatprep.subr.mxu0 0.0
    %92 = vmatpush1.msra.mxu0 0.0
    %93 = vmatprep.subr.mxu0 0.0
    %94 = vmatpush1.msra.mxu0 0.0
    %95 = vmatprep.subr.mxu0 0.0
    %96 = vmatpush1.msra.mxu0 0.0
    %97 = vmatprep.subr.mxu0 0.0
    %98 = vmatpush1.msra.mxu0 0.0
    %99 = vmatprep.subr.mxu0 0.0
    %100 = vmatpush1.msra.mxu0 0.0
    %101 = vmatprep.subr.mxu0 0.0
    %102 = vmatpush1.msra.mxu0 0.0
    %103 = vmatprep.subr.mxu0 0.0
    %104 = vmatpush1.msra.mxu0 0.0
    %105 = vmatprep.subr.mxu0 0.0
    %106 = vmatpush1.msra.mxu0 0.0
    %107 = vmatprep.subr.mxu0 0.0
    %108 = vmatpush1.msra.mxu0 %v71
    %109 = vmatprep.subr.mxu0 0.0
    %110 = vmatpush1.msra.mxu0 %v70
    %111 = vmatprep.subr.mxu0 0.0
    %112 = vmatpush1.msra.mxu0 %v69
    %113 = vmatprep.subr.mxu0 0.0
    %114 = vmatpush1.msra.mxu0 %v68
    %115 = vmatprep.subr.mxu0 0.0
    %116 = vmatpush2.msra.mxu0 0.0
    %117 = vmatprep.subr.mxu0 0.0
    %118 = vmatpush2.msra.mxu0 0.0
    %119 = vmatprep.subr.mxu0 0.0
    %120 = vmatpush2.msra.mxu0 0.0
    %121 = vmatprep.subr.mxu0 0.0
    %122 = vmatpush2.msra.mxu0 0.0
    %123 = vmatprep.subr.mxu0 0.0
    %124 = vmatpush2.msra.mxu0 0.0
    %125 = vmatprep.subr.mxu0 0.0
    %126 = vmatpush2.msra.mxu0 0.0
    %127 = vmatprep.subr.mxu0 0.0
    %128 = vmatpush2.msra.mxu0 0.0
    %129 = vmatprep.subr.mxu0 0.0
    %130 = vmatpush2.msra.mxu0 0.0
    %131 = vmatprep.subr.mxu0 0.0
    %132 = vmatpush2.msra.mxu0 0.0
    %133 = vmatprep.subr.mxu0 0.0
    %134 = vmatpush2.msra.mxu0 0.0
    %135 = vmatprep.subr.mxu0 0.0
    %136 = vmatpush2.msra.mxu0 0.0
    %137 = vmatprep.subr.mxu0 0.0
    %138 = vmatpush2.msra.mxu0 0.0
    %139 = vmatprep.subr.mxu0 0.0
    %140 = vmatpush2.msra.mxu0 0.0
    %141 = vmatprep.subr.mxu0 0.0
    %142 = vmatpush2.msra.mxu0 0.0
    %143 = vmatprep.subr.mxu0 0.0
    %144 = vmatpush2.msra.mxu0 0.0
    %145 = vmatprep.subr.mxu0 0.0
    %146 = vmatpush2.msra.mxu0 0.0
    %147 = vmatprep.mubr.f32.mxu0 0.0
    %148 = vmatmul.mubr.f32.gmra.mxu0 %v81
    %v149 = vpop.f32.mrf.mxu0
    %v150 = vadd.f32 %v77, %v149
    %v151 = vpop.f32.mrf.mxu0
    %152 = vdwg.mxu0
    %v153 = vld [vmem:[%s3] sm:$0x1]
    %v154 = vld [vmem:[%s4] sm:$0x1]
    %155 = vadd.xlane.f32.xlu0 %v150
    %v156 = vpop.xlane.xlu0 %155
    %v157 = vmul.f32 %v150, %v150
    %158 = vadd.xlane.f32.xlu0 %v157
    %v159 = vpop.xlane.xlu0 %158
    %v160 = vmul.f32 %v156, 0.015625
    %v161 = vmul.f32 %v159, 0.015625
    %v162 = vmul.f32 %v160, %v160
    %v163 = vsub.f32 %v161, %v162
    %v164 = vmax.f32 %v163, 0.0
    %v165 = vsub.f32 %v150, %v160
    %v166 = vadd.f32 %v164, 1e-05
    %v167 = vrsqrt.pop %v166
    %v168 = vmul.f32 %v165, %v167
    %v170 = vlaneseq
    %v171 = vshrl.u32 %v170, 7
    %v172 = vsub.s32 0, %v171
    %v173 = vrot.slane %v153, %v172
    %v175 = vmul.f32 %v168, %v173
    %v177 = vlaneseq
    %v178 = vshrl.u32 %v177, 7
    %v179 = vsub.s32 0, %v178
    %v180 = vrot.slane %v154, %v179
    %v182 = vadd.f32 %v175, %v180
    %v183 = vmax.f32 %v182, 0.0
    %v184 = vld [vmem:[#allocation5] sm:$0xff]
    %v185 = vld [vmem:[#allocation5 + $0x8] sm:$0xff]
    %v186 = vld [vmem:[#allocation5 + $0x10] sm:$0xff]
    %v187 = vld [vmem:[#allocation5 + $0x18] sm:$0xff]
    %v188 = vld [vmem:[#allocation5 + $0x20] sm:$0xff]
    %v189 = vld [vmem:[#allocation5 + $0x28] sm:$0xff]
    %v190 = vld [vmem:[#allocation5 + $0x30] sm:$0xff]
    %v191 = vld [vmem:[#allocation5 + $0x38] sm:$0xff]
    %v192 = vld [vmem:[#allocation5 + $0x40] sm:$0xff]
    %v193 = vld [vmem:[#allocation5 + $0x48] sm:$0xff]
    %v194 = vld [vmem:[#allocation5 + $0x50] sm:$0xff]
    %v195 = vld [vmem:[#allocation5 + $0x58] sm:$0xff]
    %v196 = vld [vmem:[#allocation5 + $0x60] sm:$0xff]
    %v197 = vld [vmem:[#allocation5 + $0x68] sm:$0xff]
    %v198 = vld [vmem:[#allocation5 + $0x70] sm:$0xff]
    %v199 = vld [vmem:[#allocation5 + $0x78] sm:$0xff]
    %v200 = vld [vmem:[%s6] sm:$0x1]
    %v202 = vlaneseq
    %v203 = vshrl.u32 %v202, 7
    %v204 = vsub.s32 0, %v203
    %v205 = vrot.slane %v200, %v204
    %207 = vmatprep.subr.mxu0 0.0
    %208 = vmatpush1.msra.mxu0 %v199
    %209 = vmatprep.subr.mxu0 0.0
    %210 = vmatpush1.msra.mxu0 %v198
    %211 = vmatprep.subr.mxu0 0.0
    %212 = vmatpush1.msra.mxu0 %v197
    %213 = vmatprep.subr.mxu0 0.0
    %214 = vmatpush1.msra.mxu0 %v196
    %215 = vmatprep.subr.mxu0 0.0
    %216 = vmatpush1.msra.mxu0 %v195
    %217 = vmatprep.subr.mxu0 0.0
    %218 = vmatpush1.msra.mxu0 %v194
    %219 = vmatprep.subr.mxu0 0.0
    %220 = vmatpush1.msra.mxu0 %v193
    %221 = vmatprep.subr.mxu0 0.0
    %222 = vmatpush1.msra.mxu0 %v192
    %223 = vmatprep.subr.mxu0 0.0
    %224 = vmatpush1.msra.mxu0 %v191
    %225 = vmatprep.subr.mxu0 0.0
    %226 = vmatpush1.msra.mxu0 %v190
    %227 = vmatprep.subr.mxu0 0.0
    %228 = vmatpush1.msra.mxu0 %v189
    %229 = vmatprep.subr.mxu0 0.0
    %230 = vmatpush1.msra.mxu0 %v188
    %231 = vmatprep.subr.mxu0 0.0
    %232 = vmatpush1.msra.mxu0 %v187
    %233 = vmatprep.subr.mxu0 0.0
    %234 = vmatpush1.msra.mxu0 %v186
    %235 = vmatprep.subr.mxu0 0.0
    %236 = vmatpush1.msra.mxu0 %v185
    %237 = vmatprep.subr.mxu0 0.0
    %238 = vmatpush1.msra.mxu0 %v184
    %239 = vmatprep.subr.mxu0 0.0
    %240 = vmatpush2.msra.mxu0 0.0
    %241 = vmatprep.subr.mxu0 0.0
    %242 = vmatpush2.msra.mxu0 0.0
    %243 = vmatprep.subr.mxu0 0.0
    %244 = vmatpush2.msra.mxu0 0.0
    %245 = vmatprep.subr.mxu0 0.0
    %246 = vmatpush2.msra.mxu0 0.0
    %247 = vmatprep.subr.mxu0 0.0
    %248 = vmatpush2.msra.mxu0 0.0
    %249 = vmatprep.subr.mxu0 0.0
    %250 = vmatpush2.msra.mxu0 0.0
    %251 = vmatprep.subr.mxu0 0.0
    %252 = vmatpush2.msra.mxu0 0.0
    %253 = vmatprep.subr.mxu0 0.0
    %254 = vmatpush2.msra.mxu0 0.0
    %255 = vmatprep.subr.mxu0 0.0
    %256 = vmatpush2.msra.mxu0 0.0
    %257 = vmatprep.subr.mxu0 0.0
    %258 = vmatpush2.msra.mxu0 0.0
    %259 = vmatprep.subr.mxu0 0.0
    %260 = vmatpush2.msra.mxu0 0.0
    %261 = vmatprep.subr.mxu0 0.0
    %262 = vmatpush2.msra.mxu0 0.0
    %263 = vmatprep.subr.mxu0 0.0
    %264 = vmatpush2.msra.mxu0 0.0
    %265 = vmatprep.subr.mxu0 0.0
    %266 = vmatpush2.msra.mxu0 0.0
    %267 = vmatprep.subr.mxu0 0.0
    %268 = vmatpush2.msra.mxu0 0.0
    %269 = vmatprep.subr.mxu0 0.0
    %270 = vmatpush2.msra.mxu0 0.0
    %271 = vmatprep.mubr.f32.mxu0 0.0
    %272 = vmatmul.mubr.f32.gmra.mxu0 %v183
    %v273 = vpop.f32.mrf.mxu0
    %v274 = vadd.f32 %v205, %v273
    %v275 = vpop.f32.mrf.mxu0
    %276 = vdwg.mxu0
    %v277 = vld [vmem:[%s7] sm:$0x1]
    %v278 = vld [vmem:[%s8] sm:$0x1]
    %279 = vadd.xlane.f32.xlu0 %v274
    %v280 = vpop.xlane.xlu0 %279
    %v281 = vmul.f32 %v274, %v274
    %282 = vadd.xlane.f32.xlu0 %v281
    %v283 = vpop.xlane.xlu0 %282
    %v284 = vmul.f32 %v280, 0.03125
    %v285 = vmul.f32 %v283, 0.03125
    %v286 = vmul.f32 %v284, %v284
    %v287 = vsub.f32 %v285, %v286
    %v288 = vmax.f32 %v287, 0.0
    %v289 = vsub.f32 %v274, %v284
    %v290 = vadd.f32 %v288, 1e-05
    %v291 = vrsqrt.pop %v290
    %v292 = vmul.f32 %v289, %v291
    %v294 = vlaneseq
    %v295 = vshrl.u32 %v294, 7
    %v296 = vsub.s32 0, %v295
    %v297 = vrot.slane %v277, %v296
    %v299 = vmul.f32 %v292, %v297
    %v301 = vlaneseq
    %v302 = vshrl.u32 %v301, 7
    %v303 = vsub.s32 0, %v302
    %v304 = vrot.slane %v278, %v303
    %v306 = vadd.f32 %v299, %v304
    %v307 = vld [vmem:[%s9] sm:$0x1]
    %v309 = vlaneseq
    %v310 = vshrl.u32 %v309, 7
    %v311 = vsub.s32 0, %v310
    %v312 = vrot.slane %v307, %v311
    %v314 = vmul.f32 %v306, %v312
    %315 = vadd.xlane.f32.xlu0 %v314
    %v316 = vpop.xlane.xlu0 %315
    %s317 = sld [smem:[#allocation2]]
    %v318 = vstv %s317
    %v319 = vadd.f32 %v316, %v318
    %vm320 = vcmask 7168
    %321 = vst.msk [vmem:[%s11] sm:$0xff] %vm320, %v319
    // Predicated region
    $region54: #{_forward_impl.1} parent=1 // pred_check
      _
    $region55: #{_forward_impl.1} parent=1 // pred_check_branch
      %323 = sbr.rel (0) target = $region57
    $region56: #{_forward_impl.1} parent=1 // pred_region
      _
    $region57: #{_forward_impl.1} parent=1 // pred_fallthru
      _
    // Predicated region
    $region58: #{_forward_impl.1} parent=1 // pred_check
      _
    $region59: #{_forward_impl.1} parent=1 // pred_check_branch
      %325 = sbr.rel (0) target = $region61
    $region60: #{_forward_impl.1} parent=1 // pred_region
      _
    $region61: #{_forward_impl.1} parent=1 // pred_fallthru
      _
    %326 = vsyncpa [#allocation4], 1
    %327 = vsyncpa [#allocation6], 1

</llo_original>
